<compile_context>
chip_gen: v7x
topology: tpu7x:2x2x1
jax: 0.10.0
libtpu: 0.0.40
codegen_flags: <defaults>
</compile_context>

<pallas_src>
import jax
import jax.numpy as jnp
from jax.experimental import pallas as pl
from jax.experimental.pallas import tpu as pltpu

IN_DIM = 28 * 28   # 784
HID = 20
OUT_DIM = 10       # num classes of the synthetic last_layer
M = 4              # modules per layer (args.M)
LANES = 128        # lane-dense width for every matmul output

# bf16 weight slab: three 128x128 lane-dense blocks (layer2, layer3, last layer)
W2_ROW, W3_ROW, WL_ROW = 0, LANES, 2 * LANES
SLAB_ROWS = 3 * LANES                      # 384 rows x 128 lanes bf16 ~= 96 KiB
# f32 bias slab rows
B1_ROW, B2_ROW, B3_ROW, BL_ROW = 0, 1, 2, 3
BIAS_ROWS = 8                              # padded to a sublane multiple


# ----------------------------- Pallas kernel ------------------------------ #
def pathnet_kernel(x_ref, w1_ref, slab_ref, bias_ref, o_ref):
    # cast x in-kernel: cheap VPU op hidden under the x DMA (no wrapper pass)
    x = x_ref[...].astype(jnp.bfloat16)                       # (TB, IN_DIM)

    def layer(h_bf16, w_bf16, bias_row):
        z = jnp.dot(h_bf16, w_bf16, preferred_element_type=jnp.float32)
        z = z + bias_ref[bias_row:bias_row + 1, :]            # f32 bias row
        return jnp.maximum(z, 0.0)                            # (TB, LANES) f32

    h1 = layer(x, w1_ref[...], B1_ROW)
    h2 = layer(h1.astype(jnp.bfloat16), slab_ref[W2_ROW:W2_ROW + LANES, :], B2_ROW)
    h3 = layer(h2.astype(jnp.bfloat16), slab_ref[W3_ROW:W3_ROW + LANES, :], B3_ROW)

    out = jnp.dot(h3.astype(jnp.bfloat16), slab_ref[WL_ROW:WL_ROW + LANES, :],
                  preferred_element_type=jnp.float32)
    out = out + bias_ref[BL_ROW:BL_ROW + 1, :]
    o_ref[...] = out.astype(o_ref.dtype)      # bf16 lane-dense store (half writeback)


# ------------------------- one-time weight packing ------------------------- #
def _active(pathway_row):
    # First two unique active module indices.  PyTorch uses list(set(...)); for
    # small non-negative ints CPython iterates sets in ascending order, which we
    # make explicit (and deterministic) with sorted().
    return sorted(set(int(i) for i in pathway_row))[:2]


def prepare_pathnet_params(layer_params, last_w, last_b, pathway):
    """Pack all operands once (pathway + weights are static across forward calls).

    Delayed-sum trick: sum_layer adds the two relu'd branch outputs before the
    next Linear.  Since the next matmul is linear in its input, we keep the
    branch outputs side-by-side in lane groups [0:20)/[20:40) and absorb the sum
    into the next layer's weights by stacking them along K:
        [relu_a | relu_b] @ [[W];[W]] == (relu_a + relu_b) @ W
    so the kernel never does a cross-lane slice/add.
    """
    (w1s, b1s), (w2s, b2s), (w3s, b3s) = layer_params
    a1, a2, a3 = _active(pathway[0]), _active(pathway[1]), _active(pathway[2])
    n1, n2, n3 = len(a1), len(a2), len(a3)

    # layer-1 fused weight (branches in adjacent 20-lane groups, zero elsewhere)
    w1 = jnp.zeros((IN_DIM, LANES), jnp.float32)
    for j, m in enumerate(a1):
        w1 = w1.at[:, j * HID:(j + 1) * HID].set(w1s[m])

    def stacked(ws, active, n_prev):
        blk = jnp.zeros((LANES, LANES), jnp.float32)
        for i in range(n_prev):                 # K-stacking = delayed branch sum
            for j, m in enumerate(active):
                blk = blk.at[i * HID:(i + 1) * HID, j * HID:(j + 1) * HID].set(ws[m])
        return blk

    wl = jnp.zeros((LANES, LANES), jnp.float32)
    for i in range(n3):
        wl = wl.at[i * HID:(i + 1) * HID, :OUT_DIM].set(last_w)

    slab = jnp.zeros((SLAB_ROWS, LANES), jnp.float32)
    slab = slab.at[W2_ROW:W2_ROW + LANES, :].set(stacked(w2s, a2, n1))
    slab = slab.at[W3_ROW:W3_ROW + LANES, :].set(stacked(w3s, a3, n2))
    slab = slab.at[WL_ROW:WL_ROW + LANES, :].set(wl)

    # biases stay f32 (tiny; avoids a second bf16 rounding stage)
    bias = jnp.zeros((BIAS_ROWS, LANES), jnp.float32)
    bias = bias.at[B1_ROW, :n1 * HID].set(jnp.concatenate([b1s[m] for m in a1]))
    bias = bias.at[B2_ROW, :n2 * HID].set(jnp.concatenate([b2s[m] for m in a2]))
    bias = bias.at[B3_ROW, :n3 * HID].set(jnp.concatenate([b3s[m] for m in a3]))
    bias = bias.at[BL_ROW, :OUT_DIM].set(last_b)

    return w1.astype(jnp.bfloat16), slab.astype(jnp.bfloat16), bias


# ------------------------------ JAX wrapper -------------------------------- #
def _tile_rows(batch):
    # 16-row granule (bf16 output sublane packing); single tile for small B,
    # otherwise >=2 tiles (v7x 2-TC sharding) capped at 512 rows (~85% of HBM
    # roofline, ~4 MiB double-buffered VMEM -> fine on v5e/v6e/v7x defaults).
    b = max(16, -(-batch // 16) * 16)
    if b <= 128:
        return b
    half = (-(-b // 2) + 127) // 128 * 128
    return min(512, half)


def pathnet_forward(x, prepared):
    w1, slab, bias = prepared
    batch = x.shape[0]
    tb = _tile_rows(batch)
    n_tiles = pl.cdiv(batch, tb)

    cost = pl.CostEstimate(
        flops=2 * batch * (IN_DIM * LANES + 3 * LANES * LANES),
        transcendentals=0,
        bytes_accessed=(batch * IN_DIM * 4 + batch * LANES * 2
                        + w1.size * 2 + slab.size * 2 + bias.size * 4))

    out = pl.pallas_call(
        pathnet_kernel,
        out_shape=jax.ShapeDtypeStruct((batch, LANES), jnp.bfloat16),
        grid=(n_tiles,),
        in_specs=[
            pl.BlockSpec((tb, IN_DIM), lambda i: (i, 0)),        # x tile (f32 in HBM)
            pl.BlockSpec((IN_DIM, LANES), lambda i: (0, 0)),     # fused W1 (resident)
            pl.BlockSpec((SLAB_ROWS, LANES), lambda i: (0, 0)),  # bf16 weight slab
            pl.BlockSpec((BIAS_ROWS, LANES), lambda i: (0, 0)),  # f32 bias slab
        ],
        out_specs=pl.BlockSpec((tb, LANES), lambda i: (i, 0)),
        compiler_params=pltpu.CompilerParams(
            dimension_semantics=("parallel",)),                  # v7x: shard tiles
        cost_estimate=cost,
    )(x, w1, slab, bias)

    return out[:, :OUT_DIM].astype(jnp.float32)


# --------------------------- deterministic init ---------------------------- #
def init_linear_stack(key, n_modules, fan_in, fan_out):
    """PyTorch nn.Linear default init: U(-1/sqrt(fan_in), 1/sqrt(fan_in))."""
    bound = 1.0 / (fan_in ** 0.5)
    kw, kb = jax.random.split(key)
    ws = jax.random.uniform(kw, (n_modules, fan_in, fan_out), jnp.float32,
                            -bound, bound)
    bs = jax.random.uniform(kb, (n_modules, fan_out), jnp.float32,
                            -bound, bound)
    return ws, bs


def reference_forward(x, layer_params, last_w, last_b, pathway):
    """Pure-JAX f32 reference of the PyTorch forward (correctness check)."""
    h = x
    for (ws, bs), row in zip(layer_params, pathway):
        active = _active(row)
        outs = [jax.nn.relu(h @ ws[m] + bs[m]) for m in active]
        h = outs[0] if len(outs) == 1 else outs[0] + outs[1]
    return h @ last_w + last_b


# ---------------------------------- main ----------------------------------- #
if __name__ == "__main__":
    key = jax.random.PRNGKey(0)
    kx, k1, k2, k3, kl = jax.random.split(key, 5)

    layer_params = (
        init_linear_stack(k1, M, IN_DIM, HID),
        init_linear_stack(k2, M, HID, HID),
        init_linear_stack(k3, M, HID, HID),
    )
    # last_layer = nn.Linear(20, 10), installed via initialize_new_task()
    last_ws, last_bs = init_linear_stack(kl, 1, HID, OUT_DIM)
    last_w, last_b = last_ws[0], last_bs[0]

    # pathway: 3 rows of module indices (duplicates allowed, like the paper)
    pathway = [[0, 2, 0], [1, 3], [2]]

    # one-time packing, hoisted out of the per-batch call path
    prepared = prepare_pathnet_params(layer_params, last_w, last_b, pathway)

    # B=2 matches the tiny original example; B=300 exercises multi-tile + ragged edge.
    for B in (2, 300):
        xb = jax.random.normal(jax.random.fold_in(kx, B), (B, IN_DIM), jnp.float32)
        out = jax.block_until_ready(pathnet_forward(xb, prepared))
        ref = reference_forward(xb, layer_params, last_w, last_b, pathway)
        assert out.shape == (B, OUT_DIM)
        # bf16 operands/output with f32 MXU accumulation -> loose-but-tight tol
        assert jnp.allclose(out, ref, atol=3e-2, rtol=3e-2), f"mismatch B={B}"

    print("KERNEL_OK")
</pallas_src>

<mosaic_0001>
module attributes {stable_mosaic.version = 11 : i64} {
  func.func @pathnet_kernel(%arg0: i32, %arg1: memref<16x784xf32, #tpu.memory_space<vmem>>, %arg2: memref<784x128xbf16, #tpu.memory_space<vmem>>, %arg3: memref<384x128xbf16, #tpu.memory_space<vmem>>, %arg4: memref<8x128xf32, #tpu.memory_space<vmem>>, %arg5: memref<16x128xbf16, #tpu.memory_space<vmem>>) attributes {dimension_semantics = [#tpu.dimension_semantics<parallel>], iteration_bounds = array<i64: 1>, scalar_prefetch = 0 : i64, scratch_operands = 0 : i64, tpu.core_type = #tpu.core_type<tc>, window_params = [{transform_indices = @transform_0, window_bounds = array<i64: 16, 784>}, {pipeline_mode = #tpu.pipeline_mode<synchronous>, transform_indices = @transform_1, window_bounds = array<i64: 784, 128>}, {pipeline_mode = #tpu.pipeline_mode<synchronous>, transform_indices = @transform_2, window_bounds = array<i64: 384, 128>}, {pipeline_mode = #tpu.pipeline_mode<synchronous>, transform_indices = @transform_3, window_bounds = array<i64: 8, 128>}, {transform_indices = @transform_4, window_bounds = array<i64: 16, 128>}]} {
    %c0 = arith.constant 0 : index
    %c0_0 = arith.constant 0 : index
    %0 = vector.load %arg1[%c0, %c0_0] : memref<16x784xf32, #tpu.memory_space<vmem>>, vector<16x784xf32>
    %1 = arith.truncf %0 : vector<16x784xf32> to vector<16x784xbf16>
    %c0_1 = arith.constant 0 : index
    %c0_2 = arith.constant 0 : index
    %2 = vector.load %arg2[%c0_1, %c0_2] : memref<784x128xbf16, #tpu.memory_space<vmem>>, vector<784x128xbf16>
    %cst = arith.constant dense<0.000000e+00> : vector<16x128xf32>
    %3 = tpu.matmul %1, %2, %cst {dimension_numbers = #tpu.dot_dimension_numbers<[1], [0], [0], [1], [0, 0, 1, 1], [], []>} : vector<16x784xbf16>, vector<784x128xbf16>, vector<16x128xf32> -> vector<16x128xf32>
    %c0_3 = arith.constant 0 : index
    %c0_4 = arith.constant 0 : index
    %4 = vector.load %arg4[%c0_3, %c0_4] : memref<8x128xf32, #tpu.memory_space<vmem>>, vector<1x128xf32>
    %5 = vector.broadcast %4 : vector<1x128xf32> to vector<16x128xf32>
    %6 = arith.addf %3, %5 : vector<16x128xf32>
    %cst_5 = arith.constant 0.000000e+00 : f32
    %7 = vector.broadcast %cst_5 : f32 to vector<16x128xf32>
    %8 = arith.maximumf %6, %7 : vector<16x128xf32>
    %9 = arith.truncf %8 : vector<16x128xf32> to vector<16x128xbf16>
    %c0_6 = arith.constant 0 : index
    %c0_7 = arith.constant 0 : index
    %10 = vector.load %arg3[%c0_6, %c0_7] : memref<384x128xbf16, #tpu.memory_space<vmem>>, vector<128x128xbf16>
    %cst_8 = arith.constant dense<0.000000e+00> : vector<16x128xf32>
    %11 = tpu.matmul %9, %10, %cst_8 {dimension_numbers = #tpu.dot_dimension_numbers<[1], [0], [0], [1], [0, 0, 1, 1], [], []>} : vector<16x128xbf16>, vector<128x128xbf16>, vector<16x128xf32> -> vector<16x128xf32>
    %c1 = arith.constant 1 : index
    %c0_9 = arith.constant 0 : index
    %12 = vector.load %arg4[%c1, %c0_9] : memref<8x128xf32, #tpu.memory_space<vmem>>, vector<1x128xf32>
    %13 = vector.broadcast %12 : vector<1x128xf32> to vector<16x128xf32>
    %14 = arith.addf %11, %13 : vector<16x128xf32>
    %cst_10 = arith.constant 0.000000e+00 : f32
    %15 = vector.broadcast %cst_10 : f32 to vector<16x128xf32>
    %16 = arith.maximumf %14, %15 : vector<16x128xf32>
    %17 = arith.truncf %16 : vector<16x128xf32> to vector<16x128xbf16>
    %c128 = arith.constant 128 : index
    %c0_11 = arith.constant 0 : index
    %18 = vector.load %arg3[%c128, %c0_11] : memref<384x128xbf16, #tpu.memory_space<vmem>>, vector<128x128xbf16>
    %cst_12 = arith.constant dense<0.000000e+00> : vector<16x128xf32>
    %19 = tpu.matmul %17, %18, %cst_12 {dimension_numbers = #tpu.dot_dimension_numbers<[1], [0], [0], [1], [0, 0, 1, 1], [], []>} : vector<16x128xbf16>, vector<128x128xbf16>, vector<16x128xf32> -> vector<16x128xf32>
    %c2 = arith.constant 2 : index
    %c0_13 = arith.constant 0 : index
    %20 = vector.load %arg4[%c2, %c0_13] : memref<8x128xf32, #tpu.memory_space<vmem>>, vector<1x128xf32>
    %21 = vector.broadcast %20 : vector<1x128xf32> to vector<16x128xf32>
    %22 = arith.addf %19, %21 : vector<16x128xf32>
    %cst_14 = arith.constant 0.000000e+00 : f32
    %23 = vector.broadcast %cst_14 : f32 to vector<16x128xf32>
    %24 = arith.maximumf %22, %23 : vector<16x128xf32>
    %25 = arith.truncf %24 : vector<16x128xf32> to vector<16x128xbf16>
    %c256 = arith.constant 256 : index
    %c0_15 = arith.constant 0 : index
    %26 = vector.load %arg3[%c256, %c0_15] : memref<384x128xbf16, #tpu.memory_space<vmem>>, vector<128x128xbf16>
    %cst_16 = arith.constant dense<0.000000e+00> : vector<16x128xf32>
    %27 = tpu.matmul %25, %26, %cst_16 {dimension_numbers = #tpu.dot_dimension_numbers<[1], [0], [0], [1], [0, 0, 1, 1], [], []>} : vector<16x128xbf16>, vector<128x128xbf16>, vector<16x128xf32> -> vector<16x128xf32>
    %c3 = arith.constant 3 : index
    %c0_17 = arith.constant 0 : index
    %28 = vector.load %arg4[%c3, %c0_17] : memref<8x128xf32, #tpu.memory_space<vmem>>, vector<1x128xf32>
    %29 = vector.broadcast %28 : vector<1x128xf32> to vector<16x128xf32>
    %30 = arith.addf %27, %29 : vector<16x128xf32>
    %31 = arith.truncf %30 : vector<16x128xf32> to vector<16x128xbf16>
    %c0_18 = arith.constant 0 : index
    %c0_19 = arith.constant 0 : index
    %32 = vector.load %arg5[%c0_18, %c0_19] : memref<16x128xbf16, #tpu.memory_space<vmem>>, vector<16x128xbf16>
    tpu.vector_store %arg5[%c0_18, %c0_19], %31 {strides = array<i32>} : memref<16x128xbf16, #tpu.memory_space<vmem>>, vector<16x128xbf16>,
    return
  }
  func.func @transform_0(%arg0: i32) -> (i32, i32) {
    %c0_i32 = arith.constant 0 : i32
    %c0_i32_0 = arith.constant 0 : i32
    return %arg0, %c0_i32 : i32, i32
  }
  func.func @transform_1(%arg0: i32) -> (i32, i32) {
    %c0_i32 = arith.constant 0 : i32
    %c0_i32_0 = arith.constant 0 : i32
    %c0_i32_1 = arith.constant 0 : i32
    return %c0_i32, %c0_i32_0 : i32, i32
  }
  func.func @transform_2(%arg0: i32) -> (i32, i32) {
    %c0_i32 = arith.constant 0 : i32
    %c0_i32_0 = arith.constant 0 : i32
    %c0_i32_1 = arith.constant 0 : i32
    return %c0_i32, %c0_i32_0 : i32, i32
  }
  func.func @transform_3(%arg0: i32) -> (i32, i32) {
    %c0_i32 = arith.constant 0 : i32
    %c0_i32_0 = arith.constant 0 : i32
    %c0_i32_1 = arith.constant 0 : i32
    return %c0_i32, %c0_i32_0 : i32, i32
  }
  func.func @transform_4(%arg0: i32) -> (i32, i32) {
    %c0_i32 = arith.constant 0 : i32
    %c0_i32_0 = arith.constant 0 : i32
    return %arg0, %c0_i32 : i32, i32
  }
}

</mosaic_0001>

<llo_original>
// kernel: tpu_custom_call.1
$region0: #{tpu_custom_call.1}
  #allocation0 [shape = 'u32[]', space=smem, size = 0x4, offset = 0x4, fixed_abs, tag = 'smem constant byte address 0x4 - core index']
  #allocation1 [shape = 'u32[144,128]{1,0:T(1,128)}', space=vmem, size = 0x12000, scoped, tag = 'internal scratch']
  %s0 = inlined_call_operand.hbm [shape: f32[2,784], index: 0, kind: input, shape index: {}]
  %s1 = inlined_call_operand.hbm [shape: bf16[784,128], index: 1, kind: input, shape index: {}]
  %s2 = inlined_call_operand.hbm [shape: bf16[384,128], index: 2, kind: input, shape index: {}]
  %s3 = inlined_call_operand.vmem [shape: f32[8,128], index: 3, kind: input, shape index: {}]
  %s4 = inlined_call_operand.hbm [shape: bf16[2,128], index: 4, kind: output, shape index: {}]
  %s5 = sld [smem:[#allocation0]]
  $region38: #{tpu_custom_call.1} parent=0
    _
  %s7 = ssub.s32 1, %s5
  %s8 = scalar_select 0, %s7, %s5
  $region1: #{tpu_custom_call.1} parent=0
    #allocation2 [shape = 'u8[57344]{0}', space=vmem, size = 0xe000, scoped, tag = 'input window, operand 0, single buffered']
    #allocation3 [shape = 's32[1]{0}', space=sflag, size = 0x4, scoped, tag = 'scoped memory for tpu_custom_call.1']
    #allocation4 [shape = 's32[1]{0}', space=sflag, size = 0x4, scoped, tag = 'scoped memory for tpu_custom_call.1']
    #allocation5 [shape = 'u8[200704]{0}', space=vmem, size = 0x31000, scoped, tag = 'input window, operand 1, single buffered']
    #allocation6 [shape = 's32[1]{0}', space=sflag, size = 0x4, scoped, tag = 'scoped memory for tpu_custom_call.1']
    #allocation7 [shape = 'u8[98304]{0}', space=vmem, size = 0x18000, scoped, tag = 'input window, operand 2, single buffered']
    #allocation8 [shape = 'u8[4096]{0}', space=vmem, size = 0x1000, scoped, tag = 'output window, operand 0, single buffered']
    %9 = vsyncpa [#allocation3], 0
    %10 = vsyncpa [#allocation6], 0
    %11 = vsyncpa [#allocation4], 0
    // Predicated region
    $region2: #{tpu_custom_call.1} parent=1 // pred_check
      _
    $region3: #{tpu_custom_call.1} parent=1 // pred_check_branch
      %13 = sbr.rel (0) target = $region5
    $region4: #{tpu_custom_call.1} parent=1 // pred_region
      %s15 = ssub.s32 1792, 224
      %16 = vsyncadd [#allocation3], %s15
      %s17 = sshll.u32 [#allocation2], 4
      %s18 = int_to_ptr.vmem [resolvable:$true] %s17
      %23 = dma.hbm_to_vmem [thread:$0]  %s0, 224, %s18, [#allocation3], 224, 224, 14
    $region5: #{tpu_custom_call.1} parent=1 // pred_fallthru
      _
    // Predicated region
    $region6: #{tpu_custom_call.1} parent=1 // pred_check
      _
    $region7: #{tpu_custom_call.1} parent=1 // pred_check_branch
      %25 = sbr.rel (0) target = $region9
    $region8: #{tpu_custom_call.1} parent=1 // pred_region
      %s27 = ssub.s32 6272, 6272
      %28 = vsyncadd [#allocation6], %s27
      %s29 = sshll.u32 [#allocation5], 4
      %s30 = int_to_ptr.vmem [resolvable:$true] %s29
      %35 = dma.hbm_to_vmem [thread:$0]  %s1, 6272, %s30, [#allocation6], 64, 64, 4
    $region9: #{tpu_custom_call.1} parent=1 // pred_fallthru
      _
    // Predicated region
    $region10: #{tpu_custom_call.1} parent=1 // pred_check
      _
    $region11: #{tpu_custom_call.1} parent=1 // pred_check_branch
      %37 = sbr.rel (0) target = $region13
    $region12: #{tpu_custom_call.1} parent=1 // pred_region
      %s39 = ssub.s32 3072, 3072
      %40 = vsyncadd [#allocation6], %s39
      %s41 = sshll.u32 [#allocation7], 4
      %s42 = int_to_ptr.vmem [resolvable:$true] %s41
      %47 = dma.hbm_to_vmem [thread:$0]  %s2, 3072, %s42, [#allocation6], 64, 64, 4
    $region13: #{tpu_custom_call.1} parent=1 // pred_fallthru
      _
    // Predicated region
    $region14: #{tpu_custom_call.1} parent=1 // pred_check
      _
    $region15: #{tpu_custom_call.1} parent=1 // pred_check_branch
      %49 = sbr.rel (0) target = $region17
    $region16: #{tpu_custom_call.1} parent=1 // pred_region
      _
    $region17: #{tpu_custom_call.1} parent=1 // pred_fallthru
      _
    // Predicated region
    $region18: #{tpu_custom_call.1} parent=1 // pred_check
      _
    $region19: #{tpu_custom_call.1} parent=1 // pred_check_branch
      %51 = sbr.rel (0) target = $region21
    $region20: #{tpu_custom_call.1} parent=1 // pred_region
      %52 = dma.done [#allocation3], 1792
    $region21: #{tpu_custom_call.1} parent=1 // pred_fallthru
      _
    // Predicated region
    $region22: #{tpu_custom_call.1} parent=1 // pred_check
      _
    $region23: #{tpu_custom_call.1} parent=1 // pred_check_branch
      %54 = sbr.rel (0) target = $region25
    $region24: #{tpu_custom_call.1} parent=1 // pred_region
      %55 = dma.done [#allocation6], 6272
    $region25: #{tpu_custom_call.1} parent=1 // pred_fallthru
      _
    // Predicated region
    $region26: #{tpu_custom_call.1} parent=1 // pred_check
      _
    $region27: #{tpu_custom_call.1} parent=1 // pred_check_branch
      %57 = sbr.rel (0) target = $region29
    $region28: #{tpu_custom_call.1} parent=1 // pred_region
      %58 = dma.done [#allocation6], 3072
    $region29: #{tpu_custom_call.1} parent=1 // pred_fallthru
      _
    %v60 = vld [vmem:[#allocation2] sm:$0xff]
    %v61 = vld [vmem:[#allocation2 + $0x8] sm:$0x3f]
    %v62 = vld [vmem:[#allocation2 + $0xe] sm:$0xff]
    %v63 = vld [vmem:[#allocation2 + $0x16] sm:$0x3f]
    %v64 = vld [vmem:[#allocation2 + $0x1c] sm:$0xff]
    %v65 = vld [vmem:[#allocation2 + $0x24] sm:$0x3f]
    %v66 = vld [vmem:[#allocation2 + $0x2a] sm:$0xff]
    %v67 = vld [vmem:[#allocation2 + $0x32] sm:$0x3f]
    %v68 = vld [vmem:[#allocation2 + $0x38] sm:$0xff]
    %v69 = vld [vmem:[#allocation2 + $0x40] sm:$0x3f]
    %v70 = vld [vmem:[#allocation2 + $0x46] sm:$0xff]
    %v71 = vld [vmem:[#allocation2 + $0x4e] sm:$0x3f]
    %v72 = vld [vmem:[#allocation2 + $0x54] sm:$0xff]
    %v73 = vld [vmem:[#allocation2 + $0x5c] sm:$0x3f]
    %v74 = vld [vmem:[#allocation2 + $0x62] sm:$0xff]
    %v75 = vld [vmem:[#allocation2 + $0x6a] sm:$0x3f]
    %v92 = vcombine.low %v60, %v62
    %v93 = vcombine.high %v60, %v62
    %v94 = vcombine.low %v64, %v66
    %v95 = vcombine.high %v64, %v66
    %v97 = vunpack.c.l.s4 1983009808
    %v98 = vunpack.c.0.s8 %v97
    %v99 = vlaneseq
    %v100 = vshrl.u32 %v99, 7
    %v101 = vsub.s32 %v98, %v100
    %v102 = vrot.slane %v92, %v101
    %v104 = vunpack.c.l.s4 1983009808
    %v105 = vunpack.c.0.s8 %v104
    %v106 = vlaneseq
    %v107 = vshrl.u32 %v106, 7
    %v108 = vsub.s32 %v105, %v107
    %v109 = vrot.slane %v93, %v108
    %v111 = vunpack.c.l.s4 1983009808
    %v112 = vunpack.c.0.s8 %v111
    %v113 = vlaneseq
    %v114 = vshrl.u32 %v113, 7
    %v115 = vsub.s32 %v112, %v114
    %v116 = vrot.slane %v94, %v115
    %v118 = vunpack.c.l.s4 1983009808
    %v119 = vunpack.c.0.s8 %v118
    %v120 = vlaneseq
    %v121 = vshrl.u32 %v120, 7
    %v122 = vsub.s32 %v119, %v121
    %v123 = vrot.slane %v95, %v122
    %v124 = vcombine.low %v102, %v116
    %v125 = vcombine.high %v102, %v116
    %v126 = vcombine.low %v109, %v123
    %v127 = vcombine.high %v109, %v123
    %v128 = vcombine.low %v61, %v63
    %v129 = vcombine.high %v61, %v63
    %v130 = vcombine.low %v65, %v67
    %v131 = vcombine.high %v65, %v67
    %v133 = vunpack.c.l.s4 1983009808
    %v134 = vunpack.c.0.s8 %v133
    %v135 = vlaneseq
    %v136 = vshrl.u32 %v135, 7
    %v137 = vsub.s32 %v134, %v136
    %v138 = vrot.slane %v128, %v137
    %v140 = vunpack.c.l.s4 1983009808
    %v141 = vunpack.c.0.s8 %v140
    %v142 = vlaneseq
    %v143 = vshrl.u32 %v142, 7
    %v144 = vsub.s32 %v141, %v143
    %v145 = vrot.slane %v129, %v144
    %v147 = vunpack.c.l.s4 1983009808
    %v148 = vunpack.c.0.s8 %v147
    %v149 = vlaneseq
    %v150 = vshrl.u32 %v149, 7
    %v151 = vsub.s32 %v148, %v150
    %v152 = vrot.slane %v130, %v151
    %v154 = vunpack.c.l.s4 1983009808
    %v155 = vunpack.c.0.s8 %v154
    %v156 = vlaneseq
    %v157 = vshrl.u32 %v156, 7
    %v158 = vsub.s32 %v155, %v157
    %v159 = vrot.slane %v131, %v158
    %v160 = vcombine.low %v138, %v152
    %v161 = vcombine.high %v138, %v152
    %v162 = vcombine.low %v145, %v159
    %v163 = vcombine.low %v68, %v70
    %v164 = vcombine.high %v68, %v70
    %v165 = vcombine.low %v72, %v74
    %v166 = vcombine.high %v72, %v74
    %v168 = vunpack.c.l.s4 1983009808
    %v169 = vunpack.c.0.s8 %v168
    %v170 = vlaneseq
    %v171 = vshrl.u32 %v170, 7
    %v172 = vsub.s32 %v169, %v171
    %v173 = vrot.slane %v163, %v172
    %v175 = vunpack.c.l.s4 1983009808
    %v176 = vunpack.c.0.s8 %v175
    %v177 = vlaneseq
    %v178 = vshrl.u32 %v177, 7
    %v179 = vsub.s32 %v176, %v178
    %v180 = vrot.slane %v164, %v179
    %v182 = vunpack.c.l.s4 1983009808
    %v183 = vunpack.c.0.s8 %v182
    %v184 = vlaneseq
    %v185 = vshrl.u32 %v184, 7
    %v186 = vsub.s32 %v183, %v185
    %v187 = vrot.slane %v165, %v186
    %v189 = vunpack.c.l.s4 1983009808
    %v190 = vunpack.c.0.s8 %v189
    %v191 = vlaneseq
    %v192 = vshrl.u32 %v191, 7
    %v193 = vsub.s32 %v190, %v192
    %v194 = vrot.slane %v166, %v193
    %v195 = vcombine.low %v173, %v187
    %v196 = vcombine.high %v173, %v187
    %v197 = vcombine.low %v180, %v194
    %v198 = vcombine.high %v180, %v194
    %v199 = vcombine.low %v69, %v71
    %v200 = vcombine.high %v69, %v71
    %v201 = vcombine.low %v73, %v75
    %v202 = vcombine.high %v73, %v75
    %v204 = vunpack.c.l.s4 1983009808
    %v205 = vunpack.c.0.s8 %v204
    %v206 = vlaneseq
    %v207 = vshrl.u32 %v206, 7
    %v208 = vsub.s32 %v205, %v207
    %v209 = vrot.slane %v199, %v208
    %v211 = vunpack.c.l.s4 1983009808
    %v212 = vunpack.c.0.s8 %v211
    %v213 = vlaneseq
    %v214 = vshrl.u32 %v213, 7
    %v215 = vsub.s32 %v212, %v214
    %v216 = vrot.slane %v200, %v215
    %v218 = vunpack.c.l.s4 1983009808
    %v219 = vunpack.c.0.s8 %v218
    %v220 = vlaneseq
    %v221 = vshrl.u32 %v220, 7
    %v222 = vsub.s32 %v219, %v221
    %v223 = vrot.slane %v201, %v222
    %v225 = vunpack.c.l.s4 1983009808
    %v226 = vunpack.c.0.s8 %v225
    %v227 = vlaneseq
    %v228 = vshrl.u32 %v227, 7
    %v229 = vsub.s32 %v226, %v228
    %v230 = vrot.slane %v202, %v229
    %v231 = vcombine.low %v209, %v223
    %v232 = vcombine.high %v209, %v223
    %v233 = vcombine.low %v216, %v230
    %v248 = vpack.c.bf16 %v195, %v124
    %v249 = vpack.c.bf16 %v196, %v125
    %v250 = vpack.c.bf16 %v197, %v126
    %v251 = vpack.c.bf16 %v198, %v127
    %v252 = vpack.c.bf16 %v231, %v160
    %v253 = vpack.c.bf16 %v232, %v161
    %v254 = vpack.c.bf16 %v233, %v162
    %v255 = vld [vmem:[#allocation5] sm:$0xf]
    %v256 = vld [vmem:[#allocation5 + $0x4] sm:$0xf]
    %v257 = vld [vmem:[#allocation5 + $0x8] sm:$0xf]
    %v258 = vld [vmem:[#allocation5 + $0xc] sm:$0xf]
    %v259 = vld [vmem:[#allocation5 + $0x10] sm:$0xf]
    %v260 = vld [vmem:[#allocation5 + $0x14] sm:$0xf]
    %v261 = vld [vmem:[#allocation5 + $0x18] sm:$0xf]
    %v262 = vld [vmem:[#allocation5 + $0x1c] sm:$0xf]
    %v263 = vld [vmem:[#allocation5 + $0x20] sm:$0xf]
    %v264 = vld [vmem:[#allocation5 + $0x24] sm:$0xf]
    %v265 = vld [vmem:[#allocation5 + $0x28] sm:$0xf]
    %v266 = vld [vmem:[#allocation5 + $0x2c] sm:$0xf]
    %v267 = vld [vmem:[#allocation5 + $0x30] sm:$0xf]
    %v268 = vld [vmem:[#allocation5 + $0x34] sm:$0xf]
    %v269 = vld [vmem:[#allocation5 + $0x38] sm:$0xf]
    %v270 = vld [vmem:[#allocation5 + $0x3c] sm:$0xf]
    %v271 = vld [vmem:[#allocation5 + $0x40] sm:$0xf]
    %v272 = vld [vmem:[#allocation5 + $0x44] sm:$0xf]
    %v273 = vld [vmem:[#allocation5 + $0x48] sm:$0xf]
    %v274 = vld [vmem:[#allocation5 + $0x4c] sm:$0xf]
    %v275 = vld [vmem:[#allocation5 + $0x50] sm:$0xf]
    %v276 = vld [vmem:[#allocation5 + $0x54] sm:$0xf]
    %v277 = vld [vmem:[#allocation5 + $0x58] sm:$0xf]
    %v278 = vld [vmem:[#allocation5 + $0x5c] sm:$0xf]
    %v279 = vld [vmem:[#allocation5 + $0x60] sm:$0xf]
    %v280 = vld [vmem:[#allocation5 + $0x64] sm:$0xf]
    %v281 = vld [vmem:[#allocation5 + $0x68] sm:$0xf]
    %v282 = vld [vmem:[#allocation5 + $0x6c] sm:$0xf]
    %v283 = vld [vmem:[#allocation5 + $0x70] sm:$0xf]
    %v284 = vld [vmem:[#allocation5 + $0x74] sm:$0xf]
    %v285 = vld [vmem:[#allocation5 + $0x78] sm:$0xf]
    %v286 = vld [vmem:[#allocation5 + $0x7c] sm:$0xf]
    %v287 = vld [vmem:[#allocation5 + $0x80] sm:$0xf]
    %v288 = vld [vmem:[#allocation5 + $0x84] sm:$0xf]
    %v289 = vld [vmem:[#allocation5 + $0x88] sm:$0xf]
    %v290 = vld [vmem:[#allocation5 + $0x8c] sm:$0xf]
    %v291 = vld [vmem:[#allocation5 + $0x90] sm:$0xf]
    %v292 = vld [vmem:[#allocation5 + $0x94] sm:$0xf]
    %v293 = vld [vmem:[#allocation5 + $0x98] sm:$0xf]
    %v294 = vld [vmem:[#allocation5 + $0x9c] sm:$0xf]
    %v295 = vld [vmem:[#allocation5 + $0xa0] sm:$0xf]
    %v296 = vld [vmem:[#allocation5 + $0xa4] sm:$0xf]
    %v297 = vld [vmem:[#allocation5 + $0xa8] sm:$0xf]
    %v298 = vld [vmem:[#allocation5 + $0xac] sm:$0xf]
    %v299 = vld [vmem:[#allocation5 + $0xb0] sm:$0xf]
    %v300 = vld [vmem:[#allocation5 + $0xb4] sm:$0xf]
    %v301 = vld [vmem:[#allocation5 + $0xb8] sm:$0xf]
    %v302 = vld [vmem:[#allocation5 + $0xbc] sm:$0xf]
    %v303 = vld [vmem:[#allocation5 + $0xc0] sm:$0xf]
    %v304 = vld [vmem:[#allocation5 + $0xc4] sm:$0xf]
    %v305 = vld [vmem:[#allocation5 + $0xc8] sm:$0xf]
    %v306 = vld [vmem:[#allocation5 + $0xcc] sm:$0xf]
    %v307 = vld [vmem:[#allocation5 + $0xd0] sm:$0xf]
    %v308 = vld [vmem:[#allocation5 + $0xd4] sm:$0xf]
    %v309 = vld [vmem:[#allocation5 + $0xd8] sm:$0xf]
    %v310 = vld [vmem:[#allocation5 + $0xdc] sm:$0xf]
    %v311 = vld [vmem:[#allocation5 + $0xe0] sm:$0xf]
    %v312 = vld [vmem:[#allocation5 + $0xe4] sm:$0xf]
    %v313 = vld [vmem:[#allocation5 + $0xe8] sm:$0xf]
    %v314 = vld [vmem:[#allocation5 + $0xec] sm:$0xf]
    %v315 = vld [vmem:[#allocation5 + $0xf0] sm:$0xf]
    %v316 = vld [vmem:[#allocation5 + $0xf4] sm:$0xf]
    %v317 = vld [vmem:[#allocation5 + $0xf8] sm:$0xf]
    %v318 = vld [vmem:[#allocation5 + $0xfc] sm:$0xf]
    %v319 = vld [vmem:[#allocation5 + $0x100] sm:$0xf]
    %v320 = vld [vmem:[#allocation5 + $0x104] sm:$0xf]
    %v321 = vld [vmem:[#allocation5 + $0x108] sm:$0xf]
    %v322 = vld [vmem:[#allocation5 + $0x10c] sm:$0xf]
    %v323 = vld [vmem:[#allocation5 + $0x110] sm:$0xf]
    %v324 = vld [vmem:[#allocation5 + $0x114] sm:$0xf]
    %v325 = vld [vmem:[#allocation5 + $0x118] sm:$0xf]
    %v326 = vld [vmem:[#allocation5 + $0x11c] sm:$0xf]
    %v327 = vld [vmem:[#allocation5 + $0x120] sm:$0xf]
    %v328 = vld [vmem:[#allocation5 + $0x124] sm:$0xf]
    %v329 = vld [vmem:[#allocation5 + $0x128] sm:$0xf]
    %v330 = vld [vmem:[#allocation5 + $0x12c] sm:$0xf]
    %v331 = vld [vmem:[#allocation5 + $0x130] sm:$0xf]
    %v332 = vld [vmem:[#allocation5 + $0x134] sm:$0xf]
    %v333 = vld [vmem:[#allocation5 + $0x138] sm:$0xf]
    %v334 = vld [vmem:[#allocation5 + $0x13c] sm:$0xf]
    %v335 = vld [vmem:[#allocation5 + $0x140] sm:$0xf]
    %v336 = vld [vmem:[#allocation5 + $0x144] sm:$0xf]
    %v337 = vld [vmem:[#allocation5 + $0x148] sm:$0xf]
    %v338 = vld [vmem:[#allocation5 + $0x14c] sm:$0xf]
    %v339 = vld [vmem:[#allocation5 + $0x150] sm:$0xf]
    %v340 = vld [vmem:[#allocation5 + $0x154] sm:$0xf]
    %v341 = vld [vmem:[#allocation5 + $0x158] sm:$0xf]
    %v342 = vld [vmem:[#allocation5 + $0x15c] sm:$0xf]
    %v343 = vld [vmem:[#allocation5 + $0x160] sm:$0xf]
    %v344 = vld [vmem:[#allocation5 + $0x164] sm:$0xf]
    %v345 = vld [vmem:[#allocation5 + $0x168] sm:$0xf]
    %v346 = vld [vmem:[#allocation5 + $0x16c] sm:$0xf]
    %v347 = vld [vmem:[#allocation5 + $0x170] sm:$0xf]
    %v348 = vld [vmem:[#allocation5 + $0x174] sm:$0xf]
    %v349 = vld [vmem:[#allocation5 + $0x178] sm:$0xf]
    %v350 = vld [vmem:[#allocation5 + $0x17c] sm:$0xf]
    %v351 = vld [vmem:[#allocation5 + $0x180] sm:$0xf]
    %v352 = vld [vmem:[#allocation5 + $0x184] sm:$0xf]
    %v353 = vld [vmem:[%s3] sm:$0x1]
    %v354 = vlaneseq
    %v355 = vshrl.u32 %v354, 7
    %v356 = vsub.s32 0, %v355
    %v357 = vrot.slane %v353, %v356
    %v456 = vunpack.c.l.b16 %v255
    %v457 = vunpack.c.l.b16 %v256
    %v458 = vunpack.c.l.b16 %v257
    %v459 = vunpack.c.l.b16 %v258
    %v460 = vunpack.c.l.b16 %v259
    %v461 = vunpack.c.l.b16 %v260
    %v462 = vunpack.c.l.b16 %v261
    %v463 = vunpack.c.l.b16 %v262
    %v464 = vunpack.c.l.b16 %v263
    %v465 = vunpack.c.l.b16 %v264
    %v466 = vunpack.c.l.b16 %v265
    %v467 = vunpack.c.l.b16 %v266
    %v468 = vunpack.c.l.b16 %v267
    %v469 = vunpack.c.l.b16 %v268
    %v470 = vunpack.c.l.b16 %v269
    %v471 = vunpack.c.l.b16 %v270
    %v472 = vunpack.c.l.b16 %v271
    %v473 = vunpack.c.l.b16 %v272
    %v474 = vunpack.c.l.b16 %v273
    %v475 = vunpack.c.l.b16 %v274
    %v476 = vunpack.c.l.b16 %v275
    %v477 = vunpack.c.l.b16 %v276
    %v478 = vunpack.c.l.b16 %v277
    %v479 = vunpack.c.l.b16 %v278
    %v480 = vunpack.c.l.b16 %v279
    %v481 = vunpack.c.l.b16 %v280
    %v482 = vunpack.c.l.b16 %v281
    %v483 = vunpack.c.l.b16 %v282
    %v484 = vunpack.c.l.b16 %v283
    %v485 = vunpack.c.l.b16 %v284
    %v486 = vunpack.c.l.b16 %v285
    %v487 = vunpack.c.l.b16 %v286
    %v488 = vunpack.c.l.b16 %v287
    %v489 = vunpack.c.l.b16 %v288
    %v490 = vunpack.c.l.b16 %v289
    %v491 = vunpack.c.l.b16 %v290
    %v492 = vunpack.c.l.b16 %v291
    %v493 = vunpack.c.l.b16 %v292
    %v494 = vunpack.c.l.b16 %v293
    %v495 = vunpack.c.l.b16 %v294
    %v496 = vunpack.c.l.b16 %v295
    %v497 = vunpack.c.l.b16 %v296
    %v498 = vunpack.c.l.b16 %v297
    %v499 = vunpack.c.l.b16 %v298
    %v500 = vunpack.c.l.b16 %v299
    %v501 = vunpack.c.l.b16 %v300
    %v502 = vunpack.c.l.b16 %v301
    %v503 = vunpack.c.l.b16 %v302
    %v504 = vunpack.c.l.b16 %v303
    %v505 = vunpack.c.l.b16 %v304
    %v506 = vunpack.c.l.b16 %v305
    %v507 = vunpack.c.l.b16 %v306
    %v508 = vunpack.c.l.b16 %v307
    %v509 = vunpack.c.l.b16 %v308
    %v510 = vunpack.c.l.b16 %v309
    %v511 = vunpack.c.l.b16 %v310
    %v512 = vunpack.c.l.b16 %v311
    %v513 = vunpack.c.l.b16 %v312
    %v514 = vunpack.c.l.b16 %v313
    %v515 = vunpack.c.l.b16 %v314
    %v516 = vunpack.c.l.b16 %v315
    %v517 = vunpack.c.l.b16 %v316
    %v518 = vunpack.c.l.b16 %v317
    %v519 = vunpack.c.l.b16 %v318
    %v520 = vunpack.c.l.b16 %v319
    %v521 = vunpack.c.l.b16 %v320
    %v522 = vunpack.c.l.b16 %v321
    %v523 = vunpack.c.l.b16 %v322
    %v524 = vunpack.c.l.b16 %v323
    %v525 = vunpack.c.l.b16 %v324
    %v526 = vunpack.c.l.b16 %v325
    %v527 = vunpack.c.l.b16 %v326
    %v528 = vunpack.c.l.b16 %v327
    %v529 = vunpack.c.l.b16 %v328
    %v530 = vunpack.c.l.b16 %v329
    %v531 = vunpack.c.l.b16 %v330
    %v532 = vunpack.c.l.b16 %v331
    %v533 = vunpack.c.l.b16 %v332
    %v534 = vunpack.c.l.b16 %v333
    %v535 = vunpack.c.l.b16 %v334
    %v536 = vunpack.c.l.b16 %v335
    %v537 = vunpack.c.l.b16 %v336
    %v538 = vunpack.c.l.b16 %v337
    %v539 = vunpack.c.l.b16 %v338
    %v540 = vunpack.c.l.b16 %v339
    %v541 = vunpack.c.l.b16 %v340
    %v542 = vunpack.c.l.b16 %v341
    %v543 = vunpack.c.l.b16 %v342
    %v544 = vunpack.c.l.b16 %v343
    %v545 = vunpack.c.l.b16 %v344
    %v546 = vunpack.c.l.b16 %v345
    %v547 = vunpack.c.l.b16 %v346
    %v548 = vunpack.c.l.b16 %v347
    %v549 = vunpack.c.l.b16 %v348
    %v550 = vunpack.c.l.b16 %v349
    %v551 = vunpack.c.l.b16 %v350
    %v552 = vunpack.c.l.b16 %v351
    %v553 = vunpack.c.l.b16 %v352
    %v554 = vpack.c.b16 %v457, %v456
    %v555 = vpack.c.b16 %v459, %v458
    %v556 = vpack.c.b16 %v461, %v460
    %v557 = vpack.c.b16 %v463, %v462
    %v558 = vpack.c.b16 %v465, %v464
    %v559 = vpack.c.b16 %v467, %v466
    %v560 = vpack.c.b16 %v469, %v468
    %v561 = vpack.c.b16 %v471, %v470
    %v562 = vpack.c.b16 %v473, %v472
    %v563 = vpack.c.b16 %v475, %v474
    %v564 = vpack.c.b16 %v477, %v476
    %v565 = vpack.c.b16 %v479, %v478
    %v566 = vpack.c.b16 %v481, %v480
    %v567 = vpack.c.b16 %v483, %v482
    %v568 = vpack.c.b16 %v485, %v484
    %v569 = vpack.c.b16 %v487, %v486
    %v570 = vpack.c.b16 %v489, %v488
    %v571 = vpack.c.b16 %v491, %v490
    %v572 = vpack.c.b16 %v493, %v492
    %v573 = vpack.c.b16 %v495, %v494
    %v574 = vpack.c.b16 %v497, %v496
    %v575 = vpack.c.b16 %v499, %v498
    %v576 = vpack.c.b16 %v501, %v500
    %v577 = vpack.c.b16 %v503, %v502
    %v578 = vpack.c.b16 %v505, %v504
    %v579 = vpack.c.b16 %v507, %v506
    %v580 = vpack.c.b16 %v509, %v508
    %v581 = vpack.c.b16 %v511, %v510
    %v582 = vpack.c.b16 %v513, %v512
    %v583 = vpack.c.b16 %v515, %v514
    %v584 = vpack.c.b16 %v517, %v516
    %v585 = vpack.c.b16 %v519, %v518
    %v586 = vpack.c.b16 %v521, %v520
    %v587 = vpack.c.b16 %v523, %v522
    %v588 = vpack.c.b16 %v525, %v524
    %v589 = vpack.c.b16 %v527, %v526
    %v590 = vpack.c.b16 %v529, %v528
    %v591 = vpack.c.b16 %v531, %v530
    %v592 = vpack.c.b16 %v533, %v532
    %v593 = vpack.c.b16 %v535, %v534
    %v594 = vpack.c.b16 %v537, %v536
    %v595 = vpack.c.b16 %v539, %v538
    %v596 = vpack.c.b16 %v541, %v540
    %v597 = vpack.c.b16 %v543, %v542
    %v598 = vpack.c.b16 %v545, %v544
    %v599 = vpack.c.b16 %v547, %v546
    %v600 = vpack.c.b16 %v549, %v548
    %v601 = vpack.c.b16 %v551, %v550
    %v602 = vpack.c.b16 %v553, %v552
    %vm652 = vcmask 130048
    %v654 = vsel %vm652, %v254, 0
    %656 = vmatprep.subr.bf16.mxu0 0
    %657 = vmatpush1.bf16.msra.mxu0 %v554
    %658 = vmatprep.subr.bf16.mxu0 0
    %659 = vmatpush1.bf16.msra.mxu0 %v555
    %660 = vmatprep.subr.bf16.mxu0 0
    %661 = vmatpush1.bf16.msra.mxu0 %v556
    %662 = vmatprep.subr.bf16.mxu0 0
    %663 = vmatpush1.bf16.msra.mxu0 %v557
    %664 = vmatprep.subr.bf16.mxu0 0
    %665 = vmatpush1.bf16.msra.mxu0 %v558
    %666 = vmatprep.subr.bf16.mxu0 0
    %667 = vmatpush1.bf16.msra.mxu0 %v559
    %668 = vmatprep.subr.bf16.mxu0 0
    %669 = vmatpush1.bf16.msra.mxu0 %v560
    %670 = vmatprep.subr.bf16.mxu0 0
    %671 = vmatpush1.bf16.msra.mxu0 %v561
    %672 = vmatprep.subr.bf16.mxu0 0
    %673 = vmatpush1.bf16.msra.mxu0 %v562
    %674 = vmatprep.subr.bf16.mxu0 0
    %675 = vmatpush1.bf16.msra.mxu0 %v563
    %676 = vmatprep.subr.bf16.mxu0 0
    %677 = vmatpush1.bf16.msra.mxu0 %v564
    %678 = vmatprep.subr.bf16.mxu0 0
    %679 = vmatpush1.bf16.msra.mxu0 %v565
    %680 = vmatprep.subr.bf16.mxu0 0
    %681 = vmatpush1.bf16.msra.mxu0 %v566
    %682 = vmatprep.subr.bf16.mxu0 0
    %683 = vmatpush1.bf16.msra.mxu0 %v567
    %684 = vmatprep.subr.bf16.mxu0 0
    %685 = vmatpush1.bf16.msra.mxu0 %v568
    %686 = vmatprep.subr.bf16.mxu0 0
    %687 = vmatpush1.bf16.msra.mxu0 %v569
    %688 = vmatprep.mubr.bf16.mxu0 %v249
    %689 = vmatmul.mubr.bf16.gmra.mrb[0].mxu0 %v248
    %v690 = vpop.f32.mrb[0].mxu0
    %v691 = vadd.f32 %v357, %v690
    %v692 = vpop.f32.mrb[0].mxu0
    %v693 = vpop.f32.mrb[0].mxu0
    %v694 = vadd.f32 %v357, %v693
    %v695 = vpop.f32.mrb[0].mxu0
    %696 = vdwg.mxu0
    %697 = vmatprep.subr.bf16.mxu0 0
    %698 = vmatpush1.bf16.msra.mxu0 %v570
    %699 = vmatprep.subr.bf16.mxu0 0
    %700 = vmatpush1.bf16.msra.mxu0 %v571
    %701 = vmatprep.subr.bf16.mxu0 0
    %702 = vmatpush1.bf16.msra.mxu0 %v572
    %703 = vmatprep.subr.bf16.mxu0 0
    %704 = vmatpush1.bf16.msra.mxu0 %v573
    %705 = vmatprep.subr.bf16.mxu0 0
    %706 = vmatpush1.bf16.msra.mxu0 %v574
    %707 = vmatprep.subr.bf16.mxu0 0
    %708 = vmatpush1.bf16.msra.mxu0 %v575
    %709 = vmatprep.subr.bf16.mxu0 0
    %710 = vmatpush1.bf16.msra.mxu0 %v576
    %711 = vmatprep.subr.bf16.mxu0 0
    %712 = vmatpush1.bf16.msra.mxu0 %v577
    %713 = vmatprep.subr.bf16.mxu0 0
    %714 = vmatpush1.bf16.msra.mxu0 %v578
    %715 = vmatprep.subr.bf16.mxu0 0
    %716 = vmatpush1.bf16.msra.mxu0 %v579
    %717 = vmatprep.subr.bf16.mxu0 0
    %718 = vmatpush1.bf16.msra.mxu0 %v580
    %719 = vmatprep.subr.bf16.mxu0 0
    %720 = vmatpush1.bf16.msra.mxu0 %v581
    %721 = vmatprep.subr.bf16.mxu0 0
    %722 = vmatpush1.bf16.msra.mxu0 %v582
    %723 = vmatprep.subr.bf16.mxu0 0
    %724 = vmatpush1.bf16.msra.mxu0 %v583
    %725 = vmatprep.subr.bf16.mxu0 0
    %726 = vmatpush1.bf16.msra.mxu0 %v584
    %727 = vmatprep.subr.bf16.mxu0 0
    %728 = vmatpush1.bf16.msra.mxu0 %v585
    %729 = vmatprep.mubr.bf16.mxu0 %v251
    %730 = vmatmul.mubr.bf16.gmra.mrb[0].mxu0 %v250
    %v731 = vpop.f32.mrb[0].mxu0
    %v732 = vadd.f32 %v691, %v731
    %v733 = vpop.f32.mrb[0].mxu0
    %v734 = vpop.f32.mrb[0].mxu0
    %v735 = vadd.f32 %v694, %v734
    %v736 = vpop.f32.mrb[0].mxu0
    %737 = vdwg.mxu0
    %738 = vmatprep.subr.bf16.mxu0 0
    %739 = vmatpush1.bf16.msra.mxu0 %v586
    %740 = vmatprep.subr.bf16.mxu0 0
    %741 = vmatpush1.bf16.msra.mxu0 %v587
    %742 = vmatprep.subr.bf16.mxu0 0
    %743 = vmatpush1.bf16.msra.mxu0 %v588
    %744 = vmatprep.subr.bf16.mxu0 0
    %745 = vmatpush1.bf16.msra.mxu0 %v589
    %746 = vmatprep.subr.bf16.mxu0 0
    %747 = vmatpush1.bf16.msra.mxu0 %v590
    %748 = vmatprep.subr.bf16.mxu0 0
    %749 = vmatpush1.bf16.msra.mxu0 %v591
    %750 = vmatprep.subr.bf16.mxu0 0
    %751 = vmatpush1.bf16.msra.mxu0 %v592
    %752 = vmatprep.subr.bf16.mxu0 0
    %753 = vmatpush1.bf16.msra.mxu0 %v593
    %754 = vmatprep.subr.bf16.mxu0 0
    %755 = vmatpush1.bf16.msra.mxu0 %v594
    %756 = vmatprep.subr.bf16.mxu0 0
    %757 = vmatpush1.bf16.msra.mxu0 %v595
    %758 = vmatprep.subr.bf16.mxu0 0
    %759 = vmatpush1.bf16.msra.mxu0 %v596
    %760 = vmatprep.subr.bf16.mxu0 0
    %761 = vmatpush1.bf16.msra.mxu0 %v597
    %762 = vmatprep.subr.bf16.mxu0 0
    %763 = vmatpush1.bf16.msra.mxu0 %v598
    %764 = vmatprep.subr.bf16.mxu0 0
    %765 = vmatpush1.bf16.msra.mxu0 %v599
    %766 = vmatprep.subr.bf16.mxu0 0
    %767 = vmatpush1.bf16.msra.mxu0 %v600
    %768 = vmatprep.subr.bf16.mxu0 0
    %769 = vmatpush1.bf16.msra.mxu0 %v601
    %770 = vmatprep.mubr.bf16.mxu0 %v253
    %771 = vmatmul.mubr.bf16.gmra.mrb[0].mxu0 %v252
    %v772 = vpop.f32.mrb[0].mxu0
    %v773 = vadd.f32 %v732, %v772
    %v774 = vpop.f32.mrb[0].mxu0
    %v775 = vpop.f32.mrb[0].mxu0
    %v776 = vadd.f32 %v735, %v775
    %v777 = vpop.f32.mrb[0].mxu0
    %778 = vdwg.mxu0
    %779 = vmatprep.subr.bf16.mxu0 0
    %780 = vmatpush1.bf16.msra.mxu0 %v602
    %781 = vmatprep.subr.bf16.mxu0 0
    %782 = vmatpush1.bf16.msra.mxu0 0
    %783 = vmatprep.subr.bf16.mxu0 0
    %784 = vmatpush1.bf16.msra.mxu0 0
    %785 = vmatprep.subr.bf16.mxu0 0
    %786 = vmatpush1.bf16.msra.mxu0 0
    %787 = vmatprep.subr.bf16.mxu0 0
    %788 = vmatpush1.bf16.msra.mxu0 0
    %789 = vmatprep.subr.bf16.mxu0 0
    %790 = vmatpush1.bf16.msra.mxu0 0
    %791 = vmatprep.subr.bf16.mxu0 0
    %792 = vmatpush1.bf16.msra.mxu0 0
    %793 = vmatprep.subr.bf16.mxu0 0
    %794 = vmatpush1.bf16.msra.mxu0 0
    %795 = vmatprep.subr.bf16.mxu0 0
    %796 = vmatpush1.bf16.msra.mxu0 0
    %797 = vmatprep.subr.bf16.mxu0 0
    %798 = vmatpush1.bf16.msra.mxu0 0
    %799 = vmatprep.subr.bf16.mxu0 0
    %800 = vmatpush1.bf16.msra.mxu0 0
    %801 = vmatprep.subr.bf16.mxu0 0
    %802 = vmatpush1.bf16.msra.mxu0 0
    %803 = vmatprep.subr.bf16.mxu0 0
    %804 = vmatpush1.bf16.msra.mxu0 0
    %805 = vmatprep.subr.bf16.mxu0 0
    %806 = vmatpush1.bf16.msra.mxu0 0
    %807 = vmatprep.subr.bf16.mxu0 0
    %808 = vmatpush1.bf16.msra.mxu0 0
    %809 = vmatprep.subr.bf16.mxu0 0
    %810 = vmatpush1.bf16.msra.mxu0 0
    %811 = vmatprep.mubr.bf16.mxu0 0
    %812 = vmatmul.mubr.bf16.gmra.mrb[0].mxu0 %v654
    %v813 = vpop.f32.mrb[0].mxu0
    %v814 = vadd.f32 %v773, %v813
    %v815 = vpop.f32.mrb[0].mxu0
    %v816 = vpop.f32.mrb[0].mxu0
    %v817 = vadd.f32 %v776, %v816
    %v818 = vpop.f32.mrb[0].mxu0
    %819 = vdwg.mxu0
    %v820 = vmax.f32 %v814, 0.0
    %v821 = vmax.f32 %v817, 0.0
    %v822 = vpack.c.bf16 %v821, %v820
    %v823 = vld [vmem:[#allocation7] sm:$0xf]
    %v824 = vld [vmem:[#allocation7 + $0x4] sm:$0xf]
    %v825 = vld [vmem:[#allocation7 + $0x8] sm:$0xf]
    %v826 = vld [vmem:[#allocation7 + $0xc] sm:$0xf]
    %v827 = vld [vmem:[#allocation7 + $0x10] sm:$0xf]
    %v828 = vld [vmem:[#allocation7 + $0x14] sm:$0xf]
    %v829 = vld [vmem:[#allocation7 + $0x18] sm:$0xf]
    %v830 = vld [vmem:[#allocation7 + $0x1c] sm:$0xf]
    %v831 = vld [vmem:[#allocation7 + $0x20] sm:$0xf]
    %v832 = vld [vmem:[#allocation7 + $0x24] sm:$0xf]
    %v833 = vld [vmem:[#allocation7 + $0x28] sm:$0xf]
    %v834 = vld [vmem:[#allocation7 + $0x2c] sm:$0xf]
    %v835 = vld [vmem:[#allocation7 + $0x30] sm:$0xf]
    %v836 = vld [vmem:[#allocation7 + $0x34] sm:$0xf]
    %v837 = vld [vmem:[#allocation7 + $0x38] sm:$0xf]
    %v838 = vld [vmem:[#allocation7 + $0x3c] sm:$0xf]
    %v839 = vld [vmem:[%s3 + $0x1] sm:$0x1]
    %v840 = vlaneseq
    %v841 = vshrl.u32 %v840, 7
    %v842 = vsub.s32 0, %v841
    %v843 = vrot.slane %v839, %v842
    %v860 = vunpack.c.l.b16 %v823
    %v861 = vunpack.c.l.b16 %v824
    %v862 = vunpack.c.l.b16 %v825
    %v863 = vunpack.c.l.b16 %v826
    %v864 = vunpack.c.l.b16 %v827
    %v865 = vunpack.c.l.b16 %v828
    %v866 = vunpack.c.l.b16 %v829
    %v867 = vunpack.c.l.b16 %v830
    %v868 = vunpack.c.l.b16 %v831
    %v869 = vunpack.c.l.b16 %v832
    %v870 = vunpack.c.l.b16 %v833
    %v871 = vunpack.c.l.b16 %v834
    %v872 = vunpack.c.l.b16 %v835
    %v873 = vunpack.c.l.b16 %v836
    %v874 = vunpack.c.l.b16 %v837
    %v875 = vunpack.c.l.b16 %v838
    %v876 = vpack.c.b16 %v861, %v860
    %v877 = vpack.c.b16 %v863, %v862
    %v878 = vpack.c.b16 %v865, %v864
    %v879 = vpack.c.b16 %v867, %v866
    %v880 = vpack.c.b16 %v869, %v868
    %v881 = vpack.c.b16 %v871, %v870
    %v882 = vpack.c.b16 %v873, %v872
    %v883 = vpack.c.b16 %v875, %v874
    %892 = vmatprep.subr.bf16.mxu0 0
    %893 = vmatpush1.bf16.msra.mxu0 %v876
    %894 = vmatprep.subr.bf16.mxu0 0
    %895 = vmatpush1.bf16.msra.mxu0 %v877
    %896 = vmatprep.subr.bf16.mxu0 0
    %897 = vmatpush1.bf16.msra.mxu0 %v878
    %898 = vmatprep.subr.bf16.mxu0 0
    %899 = vmatpush1.bf16.msra.mxu0 %v879
    %900 = vmatprep.subr.bf16.mxu0 0
    %901 = vmatpush1.bf16.msra.mxu0 %v880
    %902 = vmatprep.subr.bf16.mxu0 0
    %903 = vmatpush1.bf16.msra.mxu0 %v881
    %904 = vmatprep.subr.bf16.mxu0 0
    %905 = vmatpush1.bf16.msra.mxu0 %v882
    %906 = vmatprep.subr.bf16.mxu0 0
    %907 = vmatpush1.bf16.msra.mxu0 %v883
    %908 = vmatprep.subr.bf16.mxu0 0
    %909 = vmatpush1.bf16.msra.mxu0 0
    %910 = vmatprep.subr.bf16.mxu0 0
    %911 = vmatpush1.bf16.msra.mxu0 0
    %912 = vmatprep.subr.bf16.mxu0 0
    %913 = vmatpush1.bf16.msra.mxu0 0
    %914 = vmatprep.subr.bf16.mxu0 0
    %915 = vmatpush1.bf16.msra.mxu0 0
    %916 = vmatprep.subr.bf16.mxu0 0
    %917 = vmatpush1.bf16.msra.mxu0 0
    %918 = vmatprep.subr.bf16.mxu0 0
    %919 = vmatpush1.bf16.msra.mxu0 0
    %920 = vmatprep.subr.bf16.mxu0 0
    %921 = vmatpush1.bf16.msra.mxu0 0
    %922 = vmatprep.subr.bf16.mxu0 0
    %923 = vmatpush1.bf16.msra.mxu0 0
    %924 = vmatprep.mubr.bf16.mxu0 0
    %925 = vmatmul.mubr.bf16.gmra.mrb[0].mxu0 %v822
    %v926 = vpop.f32.mrb[0].mxu0
    %v927 = vadd.f32 %v843, %v926
    %v928 = vpop.f32.mrb[0].mxu0
    %v929 = vpop.f32.mrb[0].mxu0
    %v930 = vadd.f32 %v843, %v929
    %v931 = vpop.f32.mrb[0].mxu0
    %932 = vdwg.mxu0
    %v933 = vmax.f32 %v927, 0.0
    %v934 = vmax.f32 %v930, 0.0
    %v935 = vpack.c.bf16 %v934, %v933
    %v936 = vld [vmem:[#allocation7 + $0x40] sm:$0xf]
    %v937 = vld [vmem:[#allocation7 + $0x44] sm:$0xf]
    %v938 = vld [vmem:[#allocation7 + $0x48] sm:$0xf]
    %v939 = vld [vmem:[#allocation7 + $0x4c] sm:$0xf]
    %v940 = vld [vmem:[#allocation7 + $0x50] sm:$0xf]
    %v941 = vld [vmem:[#allocation7 + $0x54] sm:$0xf]
    %v942 = vld [vmem:[#allocation7 + $0x58] sm:$0xf]
    %v943 = vld [vmem:[#allocation7 + $0x5c] sm:$0xf]
    %v944 = vld [vmem:[#allocation7 + $0x60] sm:$0xf]
    %v945 = vld [vmem:[#allocation7 + $0x64] sm:$0xf]
    %v946 = vld [vmem:[#allocation7 + $0x68] sm:$0xf]
    %v947 = vld [vmem:[#allocation7 + $0x6c] sm:$0xf]
    %v948 = vld [vmem:[#allocation7 + $0x70] sm:$0xf]
    %v949 = vld [vmem:[#allocation7 + $0x74] sm:$0xf]
    %v950 = vld [vmem:[#allocation7 + $0x78] sm:$0xf]
    %v951 = vld [vmem:[#allocation7 + $0x7c] sm:$0xf]
    %v952 = vld [vmem:[%s3 + $0x2] sm:$0x1]
    %v953 = vlaneseq
    %v954 = vshrl.u32 %v953, 7
    %v955 = vsub.s32 0, %v954
    %v956 = vrot.slane %v952, %v955
    %v973 = vunpack.c.l.b16 %v936
    %v974 = vunpack.c.l.b16 %v937
    %v975 = vunpack.c.l.b16 %v938
    %v976 = vunpack.c.l.b16 %v939
    %v977 = vunpack.c.l.b16 %v940
    %v978 = vunpack.c.l.b16 %v941
    %v979 = vunpack.c.l.b16 %v942
    %v980 = vunpack.c.l.b16 %v943
    %v981 = vunpack.c.l.b16 %v944
    %v982 = vunpack.c.l.b16 %v945
    %v983 = vunpack.c.l.b16 %v946
    %v984 = vunpack.c.l.b16 %v947
    %v985 = vunpack.c.l.b16 %v948
    %v986 = vunpack.c.l.b16 %v949
    %v987 = vunpack.c.l.b16 %v950
    %v988 = vunpack.c.l.b16 %v951
    %v989 = vpack.c.b16 %v974, %v973
    %v990 = vpack.c.b16 %v976, %v975
    %v991 = vpack.c.b16 %v978, %v977
    %v992 = vpack.c.b16 %v980, %v979
    %v993 = vpack.c.b16 %v982, %v981
    %v994 = vpack.c.b16 %v984, %v983
    %v995 = vpack.c.b16 %v986, %v985
    %v996 = vpack.c.b16 %v988, %v987
    %1005 = vmatprep.subr.bf16.mxu0 0
    %1006 = vmatpush1.bf16.msra.mxu0 %v989
    %1007 = vmatprep.subr.bf16.mxu0 0
    %1008 = vmatpush1.bf16.msra.mxu0 %v990
    %1009 = vmatprep.subr.bf16.mxu0 0
    %1010 = vmatpush1.bf16.msra.mxu0 %v991
    %1011 = vmatprep.subr.bf16.mxu0 0
    %1012 = vmatpush1.bf16.msra.mxu0 %v992
    %1013 = vmatprep.subr.bf16.mxu0 0
    %1014 = vmatpush1.bf16.msra.mxu0 %v993
    %1015 = vmatprep.subr.bf16.mxu0 0
    %1016 = vmatpush1.bf16.msra.mxu0 %v994
    %1017 = vmatprep.subr.bf16.mxu0 0
    %1018 = vmatpush1.bf16.msra.mxu0 %v995
    %1019 = vmatprep.subr.bf16.mxu0 0
    %1020 = vmatpush1.bf16.msra.mxu0 %v996
    %1021 = vmatprep.subr.bf16.mxu0 0
    %1022 = vmatpush1.bf16.msra.mxu0 0
    %1023 = vmatprep.subr.bf16.mxu0 0
    %1024 = vmatpush1.bf16.msra.mxu0 0
    %1025 = vmatprep.subr.bf16.mxu0 0
    %1026 = vmatpush1.bf16.msra.mxu0 0
    %1027 = vmatprep.subr.bf16.mxu0 0
    %1028 = vmatpush1.bf16.msra.mxu0 0
    %1029 = vmatprep.subr.bf16.mxu0 0
    %1030 = vmatpush1.bf16.msra.mxu0 0
    %1031 = vmatprep.subr.bf16.mxu0 0
    %1032 = vmatpush1.bf16.msra.mxu0 0
    %1033 = vmatprep.subr.bf16.mxu0 0
    %1034 = vmatpush1.bf16.msra.mxu0 0
    %1035 = vmatprep.subr.bf16.mxu0 0
    %1036 = vmatpush1.bf16.msra.mxu0 0
    %1037 = vmatprep.mubr.bf16.mxu0 0
    %1038 = vmatmul.mubr.bf16.gmra.mrb[0].mxu0 %v935
    %v1039 = vpop.f32.mrb[0].mxu0
    %v1040 = vadd.f32 %v956, %v1039
    %v1041 = vpop.f32.mrb[0].mxu0
    %v1042 = vpop.f32.mrb[0].mxu0
    %v1043 = vadd.f32 %v956, %v1042
    %v1044 = vpop.f32.mrb[0].mxu0
    %1045 = vdwg.mxu0
    %v1046 = vmax.f32 %v1040, 0.0
    %v1047 = vmax.f32 %v1043, 0.0
    %v1048 = vpack.c.bf16 %v1047, %v1046
    %v1049 = vld [vmem:[#allocation7 + $0x80] sm:$0xf]
    %v1050 = vld [vmem:[#allocation7 + $0x84] sm:$0xf]
    %v1051 = vld [vmem:[#allocation7 + $0x88] sm:$0xf]
    %v1052 = vld [vmem:[#allocation7 + $0x8c] sm:$0xf]
    %v1053 = vld [vmem:[#allocation7 + $0x90] sm:$0xf]
    %v1054 = vld [vmem:[#allocation7 + $0x94] sm:$0xf]
    %v1055 = vld [vmem:[#allocation7 + $0x98] sm:$0xf]
    %v1056 = vld [vmem:[#allocation7 + $0x9c] sm:$0xf]
    %v1057 = vld [vmem:[#allocation7 + $0xa0] sm:$0xf]
    %v1058 = vld [vmem:[#allocation7 + $0xa4] sm:$0xf]
    %v1059 = vld [vmem:[#allocation7 + $0xa8] sm:$0xf]
    %v1060 = vld [vmem:[#allocation7 + $0xac] sm:$0xf]
    %v1061 = vld [vmem:[#allocation7 + $0xb0] sm:$0xf]
    %v1062 = vld [vmem:[#allocation7 + $0xb4] sm:$0xf]
    %v1063 = vld [vmem:[#allocation7 + $0xb8] sm:$0xf]
    %v1064 = vld [vmem:[#allocation7 + $0xbc] sm:$0xf]
    %v1065 = vld [vmem:[%s3 + $0x3] sm:$0x1]
    %v1066 = vlaneseq
    %v1067 = vshrl.u32 %v1066, 7
    %v1068 = vsub.s32 0, %v1067
    %v1069 = vrot.slane %v1065, %v1068
    %v1086 = vunpack.c.l.b16 %v1049
    %v1087 = vunpack.c.l.b16 %v1050
    %v1088 = vunpack.c.l.b16 %v1051
    %v1089 = vunpack.c.l.b16 %v1052
    %v1090 = vunpack.c.l.b16 %v1053
    %v1091 = vunpack.c.l.b16 %v1054
    %v1092 = vunpack.c.l.b16 %v1055
    %v1093 = vunpack.c.l.b16 %v1056
    %v1094 = vunpack.c.l.b16 %v1057
    %v1095 = vunpack.c.l.b16 %v1058
    %v1096 = vunpack.c.l.b16 %v1059
    %v1097 = vunpack.c.l.b16 %v1060
    %v1098 = vunpack.c.l.b16 %v1061
    %v1099 = vunpack.c.l.b16 %v1062
    %v1100 = vunpack.c.l.b16 %v1063
    %v1101 = vunpack.c.l.b16 %v1064
    %v1102 = vpack.c.b16 %v1087, %v1086
    %v1103 = vpack.c.b16 %v1089, %v1088
    %v1104 = vpack.c.b16 %v1091, %v1090
    %v1105 = vpack.c.b16 %v1093, %v1092
    %v1106 = vpack.c.b16 %v1095, %v1094
    %v1107 = vpack.c.b16 %v1097, %v1096
    %v1108 = vpack.c.b16 %v1099, %v1098
    %v1109 = vpack.c.b16 %v1101, %v1100
    %1118 = vmatprep.subr.bf16.mxu0 0
    %1119 = vmatpush1.bf16.msra.mxu0 %v1102
    %1120 = vmatprep.subr.bf16.mxu0 0
    %1121 = vmatpush1.bf16.msra.mxu0 %v1103
    %1122 = vmatprep.subr.bf16.mxu0 0
    %1123 = vmatpush1.bf16.msra.mxu0 %v1104
    %1124 = vmatprep.subr.bf16.mxu0 0
    %1125 = vmatpush1.bf16.msra.mxu0 %v1105
    %1126 = vmatprep.subr.bf16.mxu0 0
    %1127 = vmatpush1.bf16.msra.mxu0 %v1106
    %1128 = vmatprep.subr.bf16.mxu0 0
    %1129 = vmatpush1.bf16.msra.mxu0 %v1107
    %1130 = vmatprep.subr.bf16.mxu0 0
    %1131 = vmatpush1.bf16.msra.mxu0 %v1108
    %1132 = vmatprep.subr.bf16.mxu0 0
    %1133 = vmatpush1.bf16.msra.mxu0 %v1109
    %1134 = vmatprep.subr.bf16.mxu0 0
    %1135 = vmatpush1.bf16.msra.mxu0 0
    %1136 = vmatprep.subr.bf16.mxu0 0
    %1137 = vmatpush1.bf16.msra.mxu0 0
    %1138 = vmatprep.subr.bf16.mxu0 0
    %1139 = vmatpush1.bf16.msra.mxu0 0
    %1140 = vmatprep.subr.bf16.mxu0 0
    %1141 = vmatpush1.bf16.msra.mxu0 0
    %1142 = vmatprep.subr.bf16.mxu0 0
    %1143 = vmatpush1.bf16.msra.mxu0 0
    %1144 = vmatprep.subr.bf16.mxu0 0
    %1145 = vmatpush1.bf16.msra.mxu0 0
    %1146 = vmatprep.subr.bf16.mxu0 0
    %1147 = vmatpush1.bf16.msra.mxu0 0
    %1148 = vmatprep.subr.bf16.mxu0 0
    %1149 = vmatpush1.bf16.msra.mxu0 0
    %1150 = vmatprep.mubr.bf16.mxu0 0
    %1151 = vmatmul.mubr.bf16.gmra.mrb[0].mxu0 %v1048
    %v1152 = vpop.f32.mrb[0].mxu0
    %v1153 = vadd.f32 %v1069, %v1152
    %v1154 = vpop.f32.mrb[0].mxu0
    %v1155 = vpop.f32.mrb[0].mxu0
    %v1156 = vadd.f32 %v1069, %v1155
    %v1157 = vpop.f32.mrb[0].mxu0
    %1158 = vdwg.mxu0
    %v1159 = vpack.c.bf16 %v1156, %v1153
    %v1161 = vcombine.high %v1159, %v1159
    %v1163 = vunpack.c.l.s4 1966171168
    %v1164 = vunpack.c.0.s8 %v1163
    %v1165 = vlaneseq
    %v1166 = vshrl.u32 %v1165, 7
    %v1167 = vsub.s32 %v1164, %v1166
    %v1168 = vrot.slane %v1159, %v1167
    %v1170 = vunpack.c.l.s4 1966171168
    %v1171 = vunpack.c.0.s8 %v1170
    %v1172 = vlaneseq
    %v1173 = vshrl.u32 %v1172, 7
    %v1174 = vsub.s32 %v1171, %v1173
    %v1175 = vrot.slane %v1161, %v1174
    %v1176 = vcombine.high %v1168, %v1168
    %v1177 = vcombine.high %v1175, %v1175
    %v1179 = vunpack.c.l.s4 1966171168
    %v1180 = vunpack.c.0.s8 %v1179
    %v1181 = vlaneseq
    %v1182 = vshrl.u32 %v1181, 7
    %v1183 = vsub.s32 %v1180, %v1182
    %v1184 = vrot.slane %v1168, %v1183
    %v1186 = vunpack.c.l.s4 1966171168
    %v1187 = vunpack.c.0.s8 %v1186
    %v1188 = vlaneseq
    %v1189 = vshrl.u32 %v1188, 7
    %v1190 = vsub.s32 %v1187, %v1189
    %v1191 = vrot.slane %v1175, %v1190
    %v1193 = vunpack.c.l.s4 1966171168
    %v1194 = vunpack.c.0.s8 %v1193
    %v1195 = vlaneseq
    %v1196 = vshrl.u32 %v1195, 7
    %v1197 = vsub.s32 %v1194, %v1196
    %v1198 = vrot.slane %v1176, %v1197
    %v1200 = vunpack.c.l.s4 1966171168
    %v1201 = vunpack.c.0.s8 %v1200
    %v1202 = vlaneseq
    %v1203 = vshrl.u32 %v1202, 7
    %v1204 = vsub.s32 %v1201, %v1203
    %v1205 = vrot.slane %v1177, %v1204
    %v1206 = vcombine.high %v1184, %v1184
    %v1207 = vcombine.high %v1191, %v1191
    %v1208 = vcombine.high %v1198, %v1198
    %v1209 = vcombine.high %v1205, %v1205
    %1218 = vst [vmem:[#allocation8] sm:$0x1] %v1184
    %1219 = vst [vmem:[#allocation8 + $0x1] sm:$0x1] %v1198
    %1220 = vst [vmem:[#allocation8 + $0x2] sm:$0x1] %v1206
    %1221 = vst [vmem:[#allocation8 + $0x3] sm:$0x1] %v1208
    %1222 = vst [vmem:[#allocation8 + $0x4] sm:$0x1] %v1191
    %1223 = vst [vmem:[#allocation8 + $0x5] sm:$0x1] %v1205
    %1224 = vst [vmem:[#allocation8 + $0x6] sm:$0x1] %v1207
    %1225 = vst [vmem:[#allocation8 + $0x7] sm:$0x1] %v1209
    // Predicated region
    $region30: #{tpu_custom_call.1} parent=1 // pred_check
      _
    $region31: #{tpu_custom_call.1} parent=1 // pred_check_branch
      %1227 = sbr.rel (0) target = $region33
    $region32: #{tpu_custom_call.1} parent=1 // pred_region
      %s1229 = ssub.s32 128, 16
      %1230 = vsyncadd [#allocation4], %s1229
      %s1231 = sshll.u32 [#allocation8], 4
      %s1232 = int_to_ptr.vmem [resolvable:$true] %s1231
      %1237 = dma.vmem_to_hbm [thread:$0]  %s1232, 16, %s4, [#allocation4], 16, 16, 1
    $region33: #{tpu_custom_call.1} parent=1 // pred_fallthru
      _
    // Predicated region
    $region34: #{tpu_custom_call.1} parent=1 // pred_check
      _
    $region35: #{tpu_custom_call.1} parent=1 // pred_check_branch
      %1239 = sbr.rel (0) target = $region37
    $region36: #{tpu_custom_call.1} parent=1 // pred_region
      %1240 = dma.done [#allocation4], 128
    $region37: #{tpu_custom_call.1} parent=1 // pred_fallthru
      _
    %1241 = vsyncpa [#allocation3], 1
    %1242 = vsyncpa [#allocation6], 1
    %1243 = vsyncpa [#allocation4], 1

</llo_original>
